<compile_context>
chip_gen: v6e
topology: v6e:2x2x1
jax: 0.10.0
libtpu: 0.0.40
codegen_flags: <defaults>
</compile_context>

<pallas_src>
import math
import functools

import jax
import jax.numpy as jnp
from jax.experimental import pallas as pl
from jax.experimental.pallas import tpu as pltpu


_VMEM_LIMIT = 64 * 1024 * 1024


# ----------------------------------------------------------------------------
# tiling helper
# ----------------------------------------------------------------------------

def _pick_tile(dim, pref, quantum):
    """Largest tile <= pref that divides dim and is a multiple of quantum, else dim."""
    if dim <= pref:
        return dim
    t = (pref // quantum) * quantum
    while t >= quantum:
        if dim % t == 0:
            return t
        t -= quantum
    return dim


# ----------------------------------------------------------------------------
# K1: fused input projections (single combined matmul) + RMSNorm in finalize
# ----------------------------------------------------------------------------

def _in_proj_kernel(x_ref, w_ref, gq_ref, gkv_ref,
                    nq_ref, nkv_ref, kr_ref, acc_ref, *, rq, rkv, eps):
    ki = pl.program_id(1)

    @pl.when(ki == 0)
    def _():
        acc_ref[...] = jnp.zeros(acc_ref.shape, jnp.float32)

    acc_ref[...] += jnp.dot(x_ref[...], w_ref[...],
                            preferred_element_type=jnp.float32)

    @pl.when(ki == pl.num_programs(1) - 1)
    def _():
        acc = acc_ref[...]
        cq = acc[:, :rq]
        ckv = acc[:, rq:rq + rkv]
        kr = acc[:, rq + rkv:]
        nq_ref[...] = (cq * jax.lax.rsqrt(jnp.mean(cq * cq, axis=-1, keepdims=True) + eps)
                       * gq_ref[...]).astype(nq_ref.dtype)
        nkv_ref[...] = (ckv * jax.lax.rsqrt(jnp.mean(ckv * ckv, axis=-1, keepdims=True) + eps)
                        * gkv_ref[...]).astype(nkv_ref.dtype)
        kr_ref[...] = kr.astype(kr_ref.dtype)


def fused_in_proj(x2, w_in, g_q, g_kv, *, rq, rkv, dr, eps=1e-6):
    M, D = x2.shape
    n_total = rq + rkv + dr
    tm = _pick_tile(M, 512, 16)       # bf16 sublane quantum
    tk = _pick_tile(D, 512, 128)
    grid = (M // tm, D // tk)
    return pl.pallas_call(
        functools.partial(_in_proj_kernel, rq=rq, rkv=rkv, eps=eps),
        grid=grid,
        in_specs=[
            pl.BlockSpec((tm, tk), lambda mi, ki: (mi, ki)),
            pl.BlockSpec((tk, n_total), lambda mi, ki: (ki, 0)),
            pl.BlockSpec((1, rq), lambda mi, ki: (0, 0)),
            pl.BlockSpec((1, rkv), lambda mi, ki: (0, 0)),
        ],
        out_specs=(
            pl.BlockSpec((tm, rq), lambda mi, ki: (mi, 0)),
            pl.BlockSpec((tm, rkv), lambda mi, ki: (mi, 0)),
            pl.BlockSpec((tm, dr), lambda mi, ki: (mi, 0)),
        ),
        out_shape=(
            jax.ShapeDtypeStruct((M, rq), jnp.bfloat16),
            jax.ShapeDtypeStruct((M, rkv), jnp.bfloat16),
            jax.ShapeDtypeStruct((M, dr), jnp.bfloat16),
        ),
        scratch_shapes=[pltpu.VMEM((tm, n_total), jnp.float32)],
        compiler_params=pltpu.CompilerParams(
            dimension_semantics=("parallel", "arbitrary"),
            vmem_limit_bytes=_VMEM_LIMIT),
    )(x2, w_in, g_q, g_kv)


# ----------------------------------------------------------------------------
# K2: q decompress (nope + rope in one matmul) + RoPE, head axis innermost
# ----------------------------------------------------------------------------

def _q_decompress_rope_kernel(nq_ref, w_ref, cos_ref, sin_ref,
                              qn_ref, qr_ref, *, nope_dim):
    y = jnp.dot(nq_ref[0], w_ref[0], preferred_element_type=jnp.float32)  # (ts, Dn+Dr)
    half = cos_ref.shape[-1]
    qn = y[:, :nope_dim]
    qe = y[:, nope_dim:nope_dim + half]
    qo = y[:, nope_dim + half:]
    cos, sin = cos_ref[...], sin_ref[...]
    qn_ref[0, 0] = qn.astype(qn_ref.dtype)
    qr_ref[0, 0] = jnp.concatenate([qe * cos - qo * sin, qe * sin + qo * cos],
                                   axis=-1).astype(qr_ref.dtype)


def q_decompress_rope(norm_q, w_q_cat, cos, sin, *, nope_dim):
    B, S, Rq = norm_q.shape
    H = w_q_cat.shape[0]
    Dr = w_q_cat.shape[2] - nope_dim
    half = Dr // 2
    ts = _pick_tile(S, 256, 16)
    return pl.pallas_call(
        functools.partial(_q_decompress_rope_kernel, nope_dim=nope_dim),
        grid=(B, S // ts, H),
        in_specs=[
            pl.BlockSpec((1, ts, Rq), lambda b, si, h: (b, si, 0)),          # resident over h
            pl.BlockSpec((1, Rq, nope_dim + Dr), lambda b, si, h: (h, 0, 0)),
            pl.BlockSpec((ts, half), lambda b, si, h: (si, 0)),
            pl.BlockSpec((ts, half), lambda b, si, h: (si, 0)),
        ],
        out_specs=(
            pl.BlockSpec((1, 1, ts, nope_dim), lambda b, si, h: (b, h, si, 0)),
            pl.BlockSpec((1, 1, ts, Dr), lambda b, si, h: (b, h, si, 0)),
        ),
        out_shape=(
            jax.ShapeDtypeStruct((B, H, S, nope_dim), jnp.bfloat16),
            jax.ShapeDtypeStruct((B, H, S, Dr), jnp.bfloat16),
        ),
        compiler_params=pltpu.CompilerParams(
            dimension_semantics=("parallel", "parallel", "arbitrary"),
            vmem_limit_bytes=_VMEM_LIMIT),
    )(norm_q, w_q_cat, cos, sin)


# ----------------------------------------------------------------------------
# K3: kv decompress (k_nope + v in one matmul) + shared k_rope rotated once
# ----------------------------------------------------------------------------

def _kv_decompress_kernel(nkv_ref, kr_ref, w_ref, cos_ref, sin_ref,
                          kn_ref, v_ref, krot_ref, *, nope_dim):
    h = pl.program_id(2)
    y = jnp.dot(nkv_ref[0], w_ref[0], preferred_element_type=jnp.float32)  # (ts, Dn+Dv)
    kn_ref[0, 0] = y[:, :nope_dim].astype(kn_ref.dtype)
    v_ref[0, 0] = y[:, nope_dim:].astype(v_ref.dtype)

    # Shared (head-invariant) k_rope: rotate once per (b, si); output block is resident
    # across the h axis, so writing only at h == 0 is sufficient.
    @pl.when(h == 0)
    def _():
        kr = kr_ref[0].astype(jnp.float32)
        half = cos_ref.shape[-1]
        ke, ko = kr[:, :half], kr[:, half:]
        cos, sin = cos_ref[...], sin_ref[...]
        krot_ref[0] = jnp.concatenate([ke * cos - ko * sin, ke * sin + ko * cos],
                                      axis=-1).astype(krot_ref.dtype)


def kv_decompress(norm_kv, k_rope, w_kv_cat, cos, sin, *, nope_dim):
    B, S, Rkv = norm_kv.shape
    H = w_kv_cat.shape[0]
    Dv = w_kv_cat.shape[2] - nope_dim
    Dr = k_rope.shape[-1]
    half = Dr // 2
    ts = _pick_tile(S, 256, 16)
    return pl.pallas_call(
        functools.partial(_kv_decompress_kernel, nope_dim=nope_dim),
        grid=(B, S // ts, H),
        in_specs=[
            pl.BlockSpec((1, ts, Rkv), lambda b, si, h: (b, si, 0)),         # resident over h
            pl.BlockSpec((1, ts, Dr), lambda b, si, h: (b, si, 0)),          # resident over h
            pl.BlockSpec((1, Rkv, nope_dim + Dv), lambda b, si, h: (h, 0, 0)),
            pl.BlockSpec((ts, half), lambda b, si, h: (si, 0)),
            pl.BlockSpec((ts, half), lambda b, si, h: (si, 0)),
        ],
        out_specs=(
            pl.BlockSpec((1, 1, ts, nope_dim), lambda b, si, h: (b, h, si, 0)),
            pl.BlockSpec((1, 1, ts, Dv), lambda b, si, h: (b, h, si, 0)),
            pl.BlockSpec((1, ts, Dr), lambda b, si, h: (b, si, 0)),
        ),
        out_shape=(
            jax.ShapeDtypeStruct((B, H, S, nope_dim), jnp.bfloat16),
            jax.ShapeDtypeStruct((B, H, S, Dv), jnp.bfloat16),
            jax.ShapeDtypeStruct((B, S, Dr), jnp.bfloat16),
        ),
        compiler_params=pltpu.CompilerParams(
            dimension_semantics=("parallel", "parallel", "arbitrary"),
            vmem_limit_bytes=_VMEM_LIMIT),
    )(norm_kv, k_rope, w_kv_cat, cos, sin)


# ----------------------------------------------------------------------------
# K4: flash-style causal attention (online softmax, skipped + DMA-elided tiles)
# ----------------------------------------------------------------------------

def _flash_attn_kernel(qn_ref, qr_ref, kn_ref, kr_ref, v_ref, o_ref,
                       m_ref, l_ref, acc_ref, *, scale, block_q, block_k):
    qi = pl.program_id(2)
    ki = pl.program_id(3)

    @pl.when(ki == 0)
    def _():
        m_ref[...] = jnp.full(m_ref.shape, -jnp.inf, jnp.float32)
        l_ref[...] = jnp.zeros(l_ref.shape, jnp.float32)
        acc_ref[...] = jnp.zeros(acc_ref.shape, jnp.float32)

    # Skip kv tiles entirely above the causal diagonal (compute skipped here, and the
    # clamped index_maps below make Pallas elide their DMAs as well).
    @pl.when(ki * block_k < (qi + 1) * block_q)
    def _():
        s = jax.lax.dot_general(qn_ref[0, 0], kn_ref[0, 0], (((1,), (1,)), ((), ())),
                                preferred_element_type=jnp.float32)
        s += jax.lax.dot_general(qr_ref[0, 0], kr_ref[0], (((1,), (1,)), ((), ())),
                                 preferred_element_type=jnp.float32)
        s *= scale
        row = qi * block_q + jax.lax.broadcasted_iota(jnp.int32, (block_q, block_k), 0)
        col = ki * block_k + jax.lax.broadcasted_iota(jnp.int32, (block_q, block_k), 1)
        s = jnp.where(row >= col, s, -jnp.inf)

        m_prev = m_ref[...]
        m_new = jnp.maximum(m_prev, jnp.max(s, axis=-1, keepdims=True))
        alpha = jnp.exp(m_prev - m_new)
        p = jnp.exp(s - m_new)
        l_ref[...] = alpha * l_ref[...] + jnp.sum(p, axis=-1, keepdims=True)
        acc_ref[...] = alpha * acc_ref[...] + jnp.dot(
            p.astype(v_ref.dtype), v_ref[0, 0], preferred_element_type=jnp.float32)
        m_ref[...] = m_new

    @pl.when(ki == pl.num_programs(3) - 1)
    def _():
        o_ref[0, 0] = (acc_ref[...] * pl.reciprocal(l_ref[...], approx=True)
                       ).astype(o_ref.dtype)


def flash_attention(q_nope, q_rope, k_nope, k_rope, value, *, scale):
    B, H, S, Dn = q_nope.shape
    Dr = q_rope.shape[-1]
    Dv = value.shape[-1]
    # tq == tk guarantees every processed row sees at least one unmasked column (NaN-safe).
    tq = tk = _pick_tile(S, 128, 16)

    def kv_map(b, h, qi, ki):
        # Clamp so causally-skipped tiles reuse the previous block index (DMA elided).
        return (b, h, jnp.minimum(ki, qi), 0)

    def kr_map(b, h, qi, ki):
        return (b, jnp.minimum(ki, qi), 0)

    return pl.pallas_call(
        functools.partial(_flash_attn_kernel, scale=scale, block_q=tq, block_k=tk),
        grid=(B, H, S // tq, S // tk),
        in_specs=[
            pl.BlockSpec((1, 1, tq, Dn), lambda b, h, qi, ki: (b, h, qi, 0)),
            pl.BlockSpec((1, 1, tq, Dr), lambda b, h, qi, ki: (b, h, qi, 0)),
            pl.BlockSpec((1, 1, tk, Dn), kv_map),
            pl.BlockSpec((1, tk, Dr), kr_map),
            pl.BlockSpec((1, 1, tk, Dv), kv_map),
        ],
        out_specs=pl.BlockSpec((1, 1, tq, Dv), lambda b, h, qi, ki: (b, h, qi, 0)),
        out_shape=jax.ShapeDtypeStruct((B, H, S, Dv), jnp.bfloat16),
        scratch_shapes=[pltpu.VMEM((tq, 1), jnp.float32),
                        pltpu.VMEM((tq, 1), jnp.float32),
                        pltpu.VMEM((tq, Dv), jnp.float32)],
        compiler_params=pltpu.CompilerParams(
            dimension_semantics=("parallel", "parallel", "parallel", "arbitrary"),
            vmem_limit_bytes=_VMEM_LIMIT),
    )(q_nope, q_rope, k_nope, k_rope, value)


# ----------------------------------------------------------------------------
# K5: output projection, reducing over head blocks (absorbs the layout change)
# ----------------------------------------------------------------------------

def _out_proj_kernel(a_ref, w_ref, o_ref, acc_ref, *, hb):
    hi = pl.program_id(2)

    @pl.when(hi == 0)
    def _():
        acc_ref[...] = jnp.zeros(acc_ref.shape, jnp.float32)

    for j in range(hb):  # static unroll over the heads in this block
        acc_ref[...] += jnp.dot(a_ref[0, j], w_ref[j],
                                preferred_element_type=jnp.float32)

    @pl.when(hi == pl.num_programs(2) - 1)
    def _():
        o_ref[0] = acc_ref[...].astype(o_ref.dtype)


def out_proj(attn, w_proj_p):
    B, H, S, Dv = attn.shape
    D = w_proj_p.shape[-1]
    hb = math.gcd(H, 4)
    ts = _pick_tile(S, 512, 16)
    return pl.pallas_call(
        functools.partial(_out_proj_kernel, hb=hb),
        grid=(B, S // ts, H // hb),
        in_specs=[
            pl.BlockSpec((1, hb, ts, Dv), lambda b, si, hi: (b, hi, si, 0)),
            pl.BlockSpec((hb, Dv, D), lambda b, si, hi: (hi, 0, 0)),
        ],
        out_specs=pl.BlockSpec((1, ts, D), lambda b, si, hi: (b, si, 0)),
        out_shape=jax.ShapeDtypeStruct((B, S, D), jnp.float32),
        scratch_shapes=[pltpu.VMEM((ts, D), jnp.float32)],
        compiler_params=pltpu.CompilerParams(
            dimension_semantics=("parallel", "parallel", "arbitrary"),
            vmem_limit_bytes=_VMEM_LIMIT),
    )(attn, w_proj_p)


# ----------------------------------------------------------------------------
# MLA forward
# ----------------------------------------------------------------------------

def mla_forward(params, x, cos, sin, cfg):
    B, S, D = x.shape
    H = cfg["num_heads"]
    Dn, Dr, Dv = cfg["nope_head_dim"], cfg["rope_head_dim"], cfg["v_head_dim"]
    Rq, Rkv = cfg["q_lora_rank"], cfg["kv_lora_rank"]
    bf16 = jnp.bfloat16

    # --- one-time weight packing (would live at module init in a real model) ---
    # rope columns: interleaved pairs -> [evens | odds] per head (q.k dot invariant since both
    # sides share the permutation); 1/num_heads folded into w_k_rope; all MXU weights in bf16.
    perm = jnp.concatenate([jnp.arange(0, Dr, 2), jnp.arange(1, Dr, 2)])
    w_in = jnp.concatenate(
        [params["w_compress_q"], params["w_compress_kv"],
         params["w_k_rope"][:, perm] * (1.0 / H)], axis=1).astype(bf16)       # (D, Rq+Rkv+Dr)
    w_q_cat = jnp.concatenate(
        [jnp.transpose(params["w_decompress_q_nope"].reshape(Rq, H, Dn), (1, 0, 2)),
         jnp.transpose(params["w_decompress_q_rope"].reshape(Rq, H, Dr)[:, :, perm], (1, 0, 2))],
        axis=-1).astype(bf16)                                                 # (H, Rq, Dn+Dr)
    w_kv_cat = jnp.concatenate(
        [jnp.transpose(params["w_decompress_k_nope"].reshape(Rkv, H, Dn), (1, 0, 2)),
         jnp.transpose(params["w_decompress_v"].reshape(Rkv, H, Dv), (1, 0, 2))],
        axis=-1).astype(bf16)                                                 # (H, Rkv, Dn+Dv)
    w_proj_p = params["w_proj"].reshape(H, Dv, D).astype(bf16)
    g_q = params["q_norm_w"].reshape(1, Rq).astype(jnp.float32)
    g_kv = params["kv_norm_w"].reshape(1, Rkv).astype(jnp.float32)

    # --- K1: fused compress projections + RMSNorm (bf16 MXU, f32 accumulation/norm) ---
    norm_q, norm_kv, k_rope = fused_in_proj(
        x.astype(bf16).reshape(B * S, D), w_in, g_q, g_kv, rq=Rq, rkv=Rkv, dr=Dr)
    norm_q = norm_q.reshape(B, S, Rq)
    norm_kv = norm_kv.reshape(B, S, Rkv)
    k_rope = k_rope.reshape(B, S, Dr)

    # --- K2/K3: decompress + RoPE (head axis innermost; shared k_rope kept un-duplicated) ---
    q_nope, q_rope = q_decompress_rope(norm_q, w_q_cat, cos, sin, nope_dim=Dn)
    k_nope, value, k_rope_rot = kv_decompress(norm_kv, k_rope, w_kv_cat, cos, sin, nope_dim=Dn)

    # --- K4: causal flash attention ---
    scale = 1.0 / math.sqrt(Dn + Dr)
    attn = flash_attention(q_nope, q_rope, k_nope, k_rope_rot, value, scale=scale)  # (B,H,S,Dv)

    # --- K5: output projection (reduces over heads; no HBM transpose) ---
    out = out_proj(attn, w_proj_p)                                            # (B, S, D) f32
    # res_dropout with p=0.0 is the identity.
    return out


# ----------------------------------------------------------------------------
# Pure-JAX f32 reference (mirrors the PyTorch forward)
# ----------------------------------------------------------------------------

def _rope_ref(x, cos, sin):
    xe, xo = x[..., 0::2], x[..., 1::2]
    re = xe * cos - xo * sin
    im = xe * sin + xo * cos
    return jnp.stack([re, im], axis=-1).reshape(x.shape)


def mla_reference(params, x, cos, sin, cfg):
    B, S, _ = x.shape
    H, Dn, Dr, Dv = (cfg["num_heads"], cfg["nope_head_dim"],
                     cfg["rope_head_dim"], cfg["v_head_dim"])
    rms = lambda v, w: v * jax.lax.rsqrt(
        jnp.mean(v * v, axis=-1, keepdims=True) + 1e-6) * w

    nq = rms(x @ params["w_compress_q"], params["q_norm_w"])
    q_nope = (nq @ params["w_decompress_q_nope"]).reshape(B, S, H, Dn).transpose(0, 2, 1, 3)
    q_rope = (nq @ params["w_decompress_q_rope"]).reshape(B, S, H, Dr).transpose(0, 2, 1, 3)
    nkv = rms(x @ params["w_compress_kv"], params["kv_norm_w"])
    k_nope = (nkv @ params["w_decompress_k_nope"]).reshape(B, S, H, Dn).transpose(0, 2, 1, 3)
    value = (nkv @ params["w_decompress_v"]).reshape(B, S, H, Dv).transpose(0, 2, 1, 3)
    k_rope = (x @ params["w_k_rope"]).reshape(B, S, 1, Dr).transpose(0, 2, 1, 3) / H

    q_rope = _rope_ref(q_rope, cos, sin)
    k_rope = _rope_ref(k_rope, cos, sin)

    q = jnp.concatenate([q_nope, q_rope], axis=-1)
    k = jnp.concatenate([k_nope, jnp.broadcast_to(k_rope, (B, H, S, Dr))], axis=-1)
    s = jnp.einsum("bhqd,bhkd->bhqk", q, k) / math.sqrt(Dn + Dr)
    mask = jnp.tril(jnp.ones((S, S), bool))
    s = jnp.where(mask, s, -jnp.inf)
    p = jax.nn.softmax(s, axis=-1)
    o = jnp.einsum("bhqk,bhkd->bhqd", p, value)
    o = o.transpose(0, 2, 1, 3).reshape(B, S, H * Dv)
    return o @ params["w_proj"]


# ----------------------------------------------------------------------------
# Main
# ----------------------------------------------------------------------------

if __name__ == "__main__":
    cfg = dict(
        d_model=32, seq_len=16, num_heads=4,
        v_head_dim=8, nope_head_dim=8, rope_head_dim=8,
        q_lora_rank=16, kv_lora_rank=16,
    )
    B, S, D = 2, cfg["seq_len"], cfg["d_model"]
    H, Dn, Dr, Dv = (cfg["num_heads"], cfg["nope_head_dim"],
                     cfg["rope_head_dim"], cfg["v_head_dim"])

    key = jax.random.PRNGKey(0)
    ks = jax.random.split(key, 10)

    def w(k, din, dout):  # stored as (in, out) == PyTorch weight.T
        return (jax.random.normal(k, (din, dout), jnp.float32)
                / math.sqrt(din)).astype(jnp.float32)

    params = {
        "w_compress_q":        w(ks[0], D, cfg["q_lora_rank"]),
        "w_decompress_q_nope": w(ks[1], cfg["q_lora_rank"], H * Dn),
        "w_decompress_q_rope": w(ks[2], cfg["q_lora_rank"], H * Dr),
        "q_norm_w":            jnp.ones((cfg["q_lora_rank"],), jnp.float32),
        "w_compress_kv":       w(ks[3], D, cfg["kv_lora_rank"]),
        "w_decompress_k_nope": w(ks[4], cfg["kv_lora_rank"], H * Dn),
        "w_decompress_v":      w(ks[5], cfg["kv_lora_rank"], H * Dv),
        "kv_norm_w":           jnp.ones((cfg["kv_lora_rank"],), jnp.float32),
        "w_k_rope":            w(ks[6], D, Dr),
        "w_proj":              w(ks[7], H * Dv, D),
    }

    x = jax.random.normal(ks[8], (B, S, D), jnp.float32)

    # freqs_cis -> (cos, sin), shape (S, Dr // 2)
    inv_freq = 1.0 / (10000.0 ** (jnp.arange(0, Dr, 2, dtype=jnp.float32) / Dr))
    angles = jnp.arange(S, dtype=jnp.float32)[:, None] * inv_freq[None, :]
    cos, sin = jnp.cos(angles), jnp.sin(angles)

    out = mla_forward(params, x, cos, sin, cfg)
    out = jax.block_until_ready(out)

    ref = mla_reference(params, x, cos, sin, cfg)
    assert out.shape == (B, S, D)
    assert bool(jnp.all(jnp.isfinite(out)))
    # tolerance accounts for bf16 MXU inputs / bf16 intermediates and the approx reciprocal
    # in the softmax finalize (f32 accumulation and f32 softmax statistics throughout).
    assert bool(jnp.allclose(out, ref, atol=5e-2, rtol=5e-2)), "mismatch vs reference"

    print("KERNEL_OK")
</pallas_src>

<mosaic_0001>
module attributes {stable_mosaic.version = 11 : i64} {
  func.func @_in_proj_kernel(%arg0: i32, %arg1: i32, %arg2: memref<32x32xbf16, #tpu.memory_space<vmem>>, %arg3: memref<32x40xbf16, #tpu.memory_space<vmem>>, %arg4: memref<1x16xf32, #tpu.memory_space<vmem>>, %arg5: memref<1x16xf32, #tpu.memory_space<vmem>>, %arg6: memref<32x16xbf16, #tpu.memory_space<vmem>>, %arg7: memref<32x16xbf16, #tpu.memory_space<vmem>>, %arg8: memref<32x8xbf16, #tpu.memory_space<vmem>>, %arg9: memref<32x40xf32, #tpu.memory_space<vmem>>) attributes {dimension_semantics = [#tpu.dimension_semantics<parallel>, #tpu.dimension_semantics<arbitrary>], iteration_bounds = array<i64: 1, 1>, scalar_prefetch = 0 : i64, scratch_operands = 1 : i64, tpu.core_type = #tpu.core_type<tc>, window_params = [{transform_indices = @transform_0, window_bounds = array<i64: 32, 32>}, {transform_indices = @transform_1, window_bounds = array<i64: 32, 40>}, {pipeline_mode = #tpu.pipeline_mode<synchronous>, transform_indices = @transform_2, window_bounds = array<i64: 1, 16>}, {pipeline_mode = #tpu.pipeline_mode<synchronous>, transform_indices = @transform_3, window_bounds = array<i64: 1, 16>}, {transform_indices = @transform_4, window_bounds = array<i64: 32, 16>}, {transform_indices = @transform_5, window_bounds = array<i64: 32, 16>}, {transform_indices = @transform_6, window_bounds = array<i64: 32, 8>}]} {
    %c0_i32 = arith.constant 0 : i32
    %0 = arith.cmpi eq, %arg1, %c0_i32 : i32
    %1 = arith.extui %0 : i1 to i32
    %c0_i32_0 = arith.constant 0 : i32
    %2 = arith.cmpi ne, %1, %c0_i32_0 : i32
    scf.if %2 {
      %cst_10 = arith.constant 0.000000e+00 : f32
      %12 = vector.broadcast %cst_10 : f32 to vector<32x40xf32>
      %c0_11 = arith.constant 0 : index
      %c0_12 = arith.constant 0 : index
      %13 = vector.load %arg9[%c0_11, %c0_12] : memref<32x40xf32, #tpu.memory_space<vmem>>, vector<32x40xf32>
      tpu.vector_store %arg9[%c0_11, %c0_12], %12 {strides = array<i32>} : memref<32x40xf32, #tpu.memory_space<vmem>>, vector<32x40xf32>,
    } else {
    }
    %c0 = arith.constant 0 : index
    %c0_1 = arith.constant 0 : index
    %3 = vector.load %arg9[%c0, %c0_1] : memref<32x40xf32, #tpu.memory_space<vmem>>, vector<32x40xf32>
    %c0_2 = arith.constant 0 : index
    %c0_3 = arith.constant 0 : index
    %4 = vector.load %arg2[%c0_2, %c0_3] : memref<32x32xbf16, #tpu.memory_space<vmem>>, vector<32x32xbf16>
    %c0_4 = arith.constant 0 : index
    %c0_5 = arith.constant 0 : index
    %5 = vector.load %arg3[%c0_4, %c0_5] : memref<32x40xbf16, #tpu.memory_space<vmem>>, vector<32x40xbf16>
    %cst = arith.constant dense<0.000000e+00> : vector<32x40xf32>
    %6 = tpu.matmul %4, %5, %cst {dimension_numbers = #tpu.dot_dimension_numbers<[1], [0], [0], [1], [0, 0, 1, 1], [], []>} : vector<32x32xbf16>, vector<32x40xbf16>, vector<32x40xf32> -> vector<32x40xf32>
    %7 = arith.addf %3, %6 : vector<32x40xf32>
    %c0_6 = arith.constant 0 : index
    %c0_7 = arith.constant 0 : index
    %8 = vector.load %arg9[%c0_6, %c0_7] : memref<32x40xf32, #tpu.memory_space<vmem>>, vector<32x40xf32>
    tpu.vector_store %arg9[%c0_6, %c0_7], %7 {strides = array<i32>} : memref<32x40xf32, #tpu.memory_space<vmem>>, vector<32x40xf32>,
    %c0_i32_8 = arith.constant 0 : i32
    %9 = arith.cmpi eq, %arg1, %c0_i32_8 : i32
    %10 = arith.extui %9 : i1 to i32
    %c0_i32_9 = arith.constant 0 : i32
    %11 = arith.cmpi ne, %10, %c0_i32_9 : i32
    scf.if %11 {
      %c0_10 = arith.constant 0 : index
      %c0_11 = arith.constant 0 : index
      %12 = vector.load %arg9[%c0_10, %c0_11] : memref<32x40xf32, #tpu.memory_space<vmem>>, vector<32x40xf32>
      %13 = vector.extract_strided_slice %12 {offsets = [0, 0], sizes = [32, 16], strides = [1, 1]} : vector<32x40xf32> to vector<32x16xf32>
      %14 = vector.extract_strided_slice %12 {offsets = [0, 16], sizes = [32, 16], strides = [1, 1]} : vector<32x40xf32> to vector<32x16xf32>
      %15 = vector.extract_strided_slice %12 {offsets = [0, 32], sizes = [32, 8], strides = [1, 1]} : vector<32x40xf32> to vector<32x8xf32>
      %16 = arith.mulf %13, %13 : vector<32x16xf32>
      %cst_12 = arith.constant dense<0.000000e+00> : vector<32xf32>
      %17 = vector.multi_reduction <add>, %16, %cst_12 [1] : vector<32x16xf32> to vector<32xf32>
      %18 = vector.shape_cast %17 : vector<32xf32> to vector<32x1xf32>
      %cst_13 = arith.constant 1.600000e+01 : f32
      %19 = vector.broadcast %cst_13 : f32 to vector<32x1xf32>
      %20 = arith.divf %18, %19 : vector<32x1xf32>
      %cst_14 = arith.constant 9.99999997E-7 : f32
      %21 = vector.broadcast %cst_14 : f32 to vector<32x1xf32>
      %22 = arith.addf %20, %21 : vector<32x1xf32>
      %23 = math.rsqrt %22 : vector<32x1xf32>
      %24 = vector.broadcast %23 : vector<32x1xf32> to vector<32x16xf32>
      %25 = arith.mulf %13, %24 : vector<32x16xf32>
      %c0_15 = arith.constant 0 : index
      %c0_16 = arith.constant 0 : index
      %26 = vector.load %arg4[%c0_15, %c0_16] : memref<1x16xf32, #tpu.memory_space<vmem>>, vector<1x16xf32>
      %27 = vector.broadcast %26 : vector<1x16xf32> to vector<32x16xf32>
      %28 = arith.mulf %25, %27 : vector<32x16xf32>
      %29 = arith.truncf %28 : vector<32x16xf32> to vector<32x16xbf16>
      %c0_17 = arith.constant 0 : index
      %c0_18 = arith.constant 0 : index
      %30 = vector.load %arg6[%c0_17, %c0_18] : memref<32x16xbf16, #tpu.memory_space<vmem>>, vector<32x16xbf16>
      tpu.vector_store %arg6[%c0_17, %c0_18], %29 {strides = array<i32>} : memref<32x16xbf16, #tpu.memory_space<vmem>>, vector<32x16xbf16>,
      %31 = arith.mulf %14, %14 : vector<32x16xf32>
      %cst_19 = arith.constant dense<0.000000e+00> : vector<32xf32>
      %32 = vector.multi_reduction <add>, %31, %cst_19 [1] : vector<32x16xf32> to vector<32xf32>
      %33 = vector.shape_cast %32 : vector<32xf32> to vector<32x1xf32>
      %cst_20 = arith.constant 1.600000e+01 : f32
      %34 = vector.broadcast %cst_20 : f32 to vector<32x1xf32>
      %35 = arith.divf %33, %34 : vector<32x1xf32>
      %cst_21 = arith.constant 9.99999997E-7 : f32
      %36 = vector.broadcast %cst_21 : f32 to vector<32x1xf32>
      %37 = arith.addf %35, %36 : vector<32x1xf32>
      %38 = math.rsqrt %37 : vector<32x1xf32>
      %39 = vector.broadcast %38 : vector<32x1xf32> to vector<32x16xf32>
      %40 = arith.mulf %14, %39 : vector<32x16xf32>
      %c0_22 = arith.constant 0 : index
      %c0_23 = arith.constant 0 : index
      %41 = vector.load %arg5[%c0_22, %c0_23] : memref<1x16xf32, #tpu.memory_space<vmem>>, vector<1x16xf32>
      %42 = vector.broadcast %41 : vector<1x16xf32> to vector<32x16xf32>
      %43 = arith.mulf %40, %42 : vector<32x16xf32>
      %44 = arith.truncf %43 : vector<32x16xf32> to vector<32x16xbf16>
      %c0_24 = arith.constant 0 : index
      %c0_25 = arith.constant 0 : index
      %45 = vector.load %arg7[%c0_24, %c0_25] : memref<32x16xbf16, #tpu.memory_space<vmem>>, vector<32x16xbf16>
      tpu.vector_store %arg7[%c0_24, %c0_25], %44 {strides = array<i32>} : memref<32x16xbf16, #tpu.memory_space<vmem>>, vector<32x16xbf16>,
      %46 = arith.truncf %15 : vector<32x8xf32> to vector<32x8xbf16>
      %c0_26 = arith.constant 0 : index
      %c0_27 = arith.constant 0 : index
      %47 = vector.load %arg8[%c0_26, %c0_27] : memref<32x8xbf16, #tpu.memory_space<vmem>>, vector<32x8xbf16>
      tpu.vector_store %arg8[%c0_26, %c0_27], %46 {strides = array<i32>} : memref<32x8xbf16, #tpu.memory_space<vmem>>, vector<32x8xbf16>,
    } else {
    }
    return
  }
  func.func @transform_0(%arg0: i32, %arg1: i32) -> (i32, i32) {
    %c0_i32 = arith.constant 0 : i32
    return %arg0, %arg1 : i32, i32
  }
  func.func @transform_1(%arg0: i32, %arg1: i32) -> (i32, i32) {
    %c0_i32 = arith.constant 0 : i32
    %c0_i32_0 = arith.constant 0 : i32
    return %arg1, %c0_i32 : i32, i32
  }
  func.func @transform_2(%arg0: i32, %arg1: i32) -> (i32, i32) {
    %c0_i32 = arith.constant 0 : i32
    %c0_i32_0 = arith.constant 0 : i32
    %c0_i32_1 = arith.constant 0 : i32
    return %c0_i32, %c0_i32_0 : i32, i32
  }
  func.func @transform_3(%arg0: i32, %arg1: i32) -> (i32, i32) {
    %c0_i32 = arith.constant 0 : i32
    %c0_i32_0 = arith.constant 0 : i32
    %c0_i32_1 = arith.constant 0 : i32
    return %c0_i32, %c0_i32_0 : i32, i32
  }
  func.func @transform_4(%arg0: i32, %arg1: i32) -> (i32, i32) {
    %c0_i32 = arith.constant 0 : i32
    %c0_i32_0 = arith.constant 0 : i32
    return %arg0, %c0_i32 : i32, i32
  }
  func.func @transform_5(%arg0: i32, %arg1: i32) -> (i32, i32) {
    %c0_i32 = arith.constant 0 : i32
    %c0_i32_0 = arith.constant 0 : i32
    return %arg0, %c0_i32 : i32, i32
  }
  func.func @transform_6(%arg0: i32, %arg1: i32) -> (i32, i32) {
    %c0_i32 = arith.constant 0 : i32
    %c0_i32_0 = arith.constant 0 : i32
    return %arg0, %c0_i32 : i32, i32
  }
}

</mosaic_0001>

<llo_original>
// kernel: tpu_custom_call.1
$region0: #{tpu_custom_call.1}
  #allocation0 [shape = 'u32[]', space=smem, size = 0x4, offset = 0x4, fixed_abs, tag = 'smem constant byte address 0x4 - core index']
  #allocation1 [shape = 'u32[144,128]{1,0:T(1,128)}', space=vmem, size = 0x12000, scoped, tag = 'internal scratch']
  #allocation2 [shape = 'f32[32,40]{1,0:T(8,128)}', space=vmem, size = 0x4000, scoped, tag = 'scratch operand']
  %s0 = inlined_call_operand.hbm [shape: bf16[32,32], index: 0, kind: input, shape index: {}]
  %s1 = inlined_call_operand.hbm [shape: bf16[32,40], index: 1, kind: input, shape index: {}]
  %s2 = inlined_call_operand.vmem [shape: f32[1,16], index: 2, kind: input, shape index: {}]
  %s3 = inlined_call_operand.vmem [shape: f32[1,16], index: 3, kind: input, shape index: {}]
  %s4 = inlined_call_operand.vmem [shape: bf16[32,16], index: 4, kind: output, shape index: {0}]
  %s5 = inlined_call_operand.vmem [shape: bf16[32,16], index: 5, kind: output, shape index: {1}]
  %s6 = inlined_call_operand.vmem [shape: bf16[32,8], index: 6, kind: output, shape index: {2}]
  %7 = xla_tuple %s4, %s5, %s6
  %s8 = sld [smem:[#allocation0]]
  $region58: #{tpu_custom_call.1} parent=0
    _
  %s10 = ssub.s32 1, %s8
  %s11 = scalar_select 0, %s10, %s8
  $region1: #{tpu_custom_call.1} parent=0
    #allocation3 [shape = 'u8[8192]{0}', space=vmem, size = 0x2000, scoped, tag = 'input window, operand 0, single buffered']
    #allocation4 [shape = 's32[1]{0}', space=sflag, size = 0x4, scoped, tag = 'scoped memory for tpu_custom_call.1']
    #allocation5 [shape = 'u8[8192]{0}', space=vmem, size = 0x2000, scoped, tag = 'input window, operand 1, single buffered']
    #allocation6 [shape = 's32[1]{0}', space=sflag, size = 0x4, scoped, tag = 'scoped memory for tpu_custom_call.1']
    %12 = vsyncpa [#allocation4], 0
    %13 = vsyncpa [#allocation6], 0
    // Predicated region
    $region2: #{tpu_custom_call.1} parent=1 // pred_check
      _
    $region3: #{tpu_custom_call.1} parent=1 // pred_check_branch
      %15 = sbr.rel (0) target = $region5
    $region4: #{tpu_custom_call.1} parent=1 // pred_region
      %s17 = ssub.s32 256, 256
      %18 = vsyncadd [#allocation4], %s17
      %s19 = sshll.u32 [#allocation3], 4
      %s20 = int_to_ptr.vmem [resolvable:$true] %s19
      %25 = dma.hbm_to_vmem [thread:$0]  %s0, 256, %s20, [#allocation4], 64, 64, 4
    $region5: #{tpu_custom_call.1} parent=1 // pred_fallthru
      _
    // Predicated region
    $region6: #{tpu_custom_call.1} parent=1 // pred_check
      _
    $region7: #{tpu_custom_call.1} parent=1 // pred_check_branch
      %27 = sbr.rel (0) target = $region9
    $region8: #{tpu_custom_call.1} parent=1 // pred_region
      %s29 = ssub.s32 256, 256
      %30 = vsyncadd [#allocation6], %s29
      %s31 = sshll.u32 [#allocation5], 4
      %s32 = int_to_ptr.vmem [resolvable:$true] %s31
      %37 = dma.hbm_to_vmem [thread:$0]  %s1, 256, %s32, [#allocation6], 64, 64, 4
    $region9: #{tpu_custom_call.1} parent=1 // pred_fallthru
      _
    // Predicated region
    $region10: #{tpu_custom_call.1} parent=1 // pred_check
      _
    $region11: #{tpu_custom_call.1} parent=1 // pred_check_branch
      %39 = sbr.rel (0) target = $region13
    $region12: #{tpu_custom_call.1} parent=1 // pred_region
      _
    $region13: #{tpu_custom_call.1} parent=1 // pred_fallthru
      _
    // Predicated region
    $region14: #{tpu_custom_call.1} parent=1 // pred_check
      _
    $region15: #{tpu_custom_call.1} parent=1 // pred_check_branch
      %41 = sbr.rel (0) target = $region17
    $region16: #{tpu_custom_call.1} parent=1 // pred_region
      _
    $region17: #{tpu_custom_call.1} parent=1 // pred_fallthru
      _
    // Predicated region
    $region18: #{tpu_custom_call.1} parent=1 // pred_check
      _
    $region19: #{tpu_custom_call.1} parent=1 // pred_check_branch
      %43 = sbr.rel (0) target = $region21
    $region20: #{tpu_custom_call.1} parent=1 // pred_region
      %44 = dma.done [#allocation4], 256
    $region21: #{tpu_custom_call.1} parent=1 // pred_fallthru
      _
    // Predicated region
    $region22: #{tpu_custom_call.1} parent=1 // pred_check
      _
    $region23: #{tpu_custom_call.1} parent=1 // pred_check_branch
      %46 = sbr.rel (0) target = $region25
    $region24: #{tpu_custom_call.1} parent=1 // pred_region
      %47 = dma.done [#allocation6], 256
    $region25: #{tpu_custom_call.1} parent=1 // pred_fallthru
      _
    %p49 = scmp.eq.s32.totalorder 0, 0
    // Predicated region
    $region26: #{tpu_custom_call.1} parent=1 // pred_check
      %p50 = pneg %p49
    $region27: #{tpu_custom_call.1} parent=1 // pred_check_branch
      %52 = sbr.rel (%p50) target = $region29
    $region28: #{tpu_custom_call.1} parent=1 // pred_region
      %vm53 = vcmask 326656
      %54 = vst.msk [vmem:[#allocation2] sm:$0xff] %vm53, 0.0
      %55 = vst.msk [vmem:[#allocation2 + $0x8] sm:$0xff] %vm53, 0.0
      %56 = vst.msk [vmem:[#allocation2 + $0x10] sm:$0xff] %vm53, 0.0
      %57 = vst.msk [vmem:[#allocation2 + $0x18] sm:$0xff] %vm53, 0.0
    $region29: #{tpu_custom_call.1} parent=1 // pred_fallthru
      _
    %v58 = vld [vmem:[#allocation2] sm:$0xff]
    %v59 = vld [vmem:[#allocation2 + $0x8] sm:$0xff]
    %v60 = vld [vmem:[#allocation2 + $0x10] sm:$0xff]
    %v61 = vld [vmem:[#allocation2 + $0x18] sm:$0xff]
    %v62 = vld [vmem:[#allocation3] sm:$0xf]
    %v63 = vld [vmem:[#allocation3 + $0x4] sm:$0xf]
    %v64 = vld [vmem:[#allocation3 + $0x8] sm:$0xf]
    %v65 = vld [vmem:[#allocation3 + $0xc] sm:$0xf]
    %v66 = vld [vmem:[#allocation5] sm:$0xf]
    %v67 = vld [vmem:[#allocation5 + $0x4] sm:$0xf]
    %v68 = vld [vmem:[#allocation5 + $0x8] sm:$0xf]
    %v69 = vld [vmem:[#allocation5 + $0xc] sm:$0xf]
    %v74 = vunpack.c.l.b16 %v62
    %v75 = vunpack.c.l.b16 %v63
    %v76 = vunpack.c.l.b16 %v64
    %v77 = vunpack.c.l.b16 %v65
    %v78 = vpack.c.b16 %v75, %v74
    %v79 = vpack.c.b16 %v77, %v76
    %v84 = vunpack.c.l.b16 %v66
    %v85 = vunpack.c.l.b16 %v67
    %v86 = vunpack.c.l.b16 %v68
    %v87 = vunpack.c.l.b16 %v69
    %v88 = vpack.c.b16 %v85, %v84
    %v89 = vpack.c.b16 %v87, %v86
    %vm92 = vcmask 261120
    %v94 = vsel %vm92, %v78, 0
    %v97 = vsel %vm92, %v79, 0
    %99 = vmatprep.subr.bf16.mxu0 0
    %100 = vmatpush1.bf16.msra.mxu0 0
    %101 = vmatprep.subr.bf16.mxu0 0
    %102 = vmatpush1.bf16.msra.mxu0 0
    %103 = vmatprep.subr.bf16.mxu0 0
    %104 = vmatpush1.bf16.msra.mxu0 0
    %105 = vmatprep.subr.bf16.mxu0 0
    %106 = vmatpush1.bf16.msra.mxu0 0
    %107 = vmatprep.subr.bf16.mxu0 0
    %108 = vmatpush1.bf16.msra.mxu0 0
    %109 = vmatprep.subr.bf16.mxu0 0
    %110 = vmatpush1.bf16.msra.mxu0 0
    %111 = vmatprep.subr.bf16.mxu0 0
    %112 = vmatpush1.bf16.msra.mxu0 %v89
    %113 = vmatprep.subr.bf16.mxu0 0
    %114 = vmatpush1.bf16.msra.mxu0 %v88
    %115 = vmatprep.subr.bf16.mxu0 0
    %116 = vmatpush2.bf16.msra.mxu0 0
    %117 = vmatprep.subr.bf16.mxu0 0
    %118 = vmatpush2.bf16.msra.mxu0 0
    %119 = vmatprep.subr.bf16.mxu0 0
    %120 = vmatpush2.bf16.msra.mxu0 0
    %121 = vmatprep.subr.bf16.mxu0 0
    %122 = vmatpush2.bf16.msra.mxu0 0
    %123 = vmatprep.subr.bf16.mxu0 0
    %124 = vmatpush2.bf16.msra.mxu0 0
    %125 = vmatprep.subr.bf16.mxu0 0
    %126 = vmatpush2.bf16.msra.mxu0 0
    %127 = vmatprep.subr.bf16.mxu0 0
    %128 = vmatpush2.bf16.msra.mxu0 0
    %129 = vmatprep.subr.bf16.mxu0 0
    %130 = vmatpush2.bf16.msra.mxu0 0
    %131 = vmatprep.mubr.bf16.mxu0 0
    %132 = vmatmul.mubr.bf16.gmra.mxu0 %v94
    %v133 = vpop.f32.mrf.mxu0
    %v134 = vadd.f32 0.0, %v133
    %v135 = vpop.f32.mrf.mxu0
    %v136 = vpop.f32.mrf.mxu0
    %v137 = vadd.f32 0.0, %v136
    %v138 = vpop.f32.mrf.mxu0
    %139 = vmatprep.mubr.bf16.mxu0 0
    %140 = vmatmul.mubr.bf16.gmra.mxu0 %v97
    %v141 = vpop.f32.mrf.mxu0
    %v142 = vadd.f32 0.0, %v141
    %v143 = vpop.f32.mrf.mxu0
    %v144 = vpop.f32.mrf.mxu0
    %v145 = vadd.f32 0.0, %v144
    %v146 = vpop.f32.mrf.mxu0
    %147 = vdwg.mxu0
    %v148 = vadd.f32 %v58, %v134
    %v149 = vadd.f32 %v59, %v137
    %v150 = vadd.f32 %v60, %v142
    %v151 = vadd.f32 %v61, %v145
    %vm152 = vcmask 326656
    %153 = vst.msk [vmem:[#allocation2] sm:$0xff] %vm152, %v148
    %154 = vst.msk [vmem:[#allocation2 + $0x8] sm:$0xff] %vm152, %v149
    %155 = vst.msk [vmem:[#allocation2 + $0x10] sm:$0xff] %vm152, %v150
    %156 = vst.msk [vmem:[#allocation2 + $0x18] sm:$0xff] %vm152, %v151
    // Predicated region
    $region30: #{tpu_custom_call.1} parent=1 // pred_check
      %p157 = pneg %p49
    $region31: #{tpu_custom_call.1} parent=1 // pred_check_branch
      %159 = sbr.rel (%p157) target = $region33
    $region32: #{tpu_custom_call.1} parent=1 // pred_region
      %v160 = vld [vmem:[#allocation2] sm:$0xff]
      %v161 = vld [vmem:[#allocation2 + $0x8] sm:$0xff]
      %v162 = vld [vmem:[#allocation2 + $0x10] sm:$0xff]
      %v163 = vld [vmem:[#allocation2 + $0x18] sm:$0xff]
      %v164 = vmul.f32 %v160, %v160
      %v165 = vmul.f32 %v161, %v161
      %v166 = vmul.f32 %v162, %v162
      %v167 = vmul.f32 %v163, %v163
      %vm168 = vcmask 130048
      %v169 = vsel %vm168, %v164, 0.0
      %170 = vadd.xlane.f32.xlu0 %v169
      %v171 = vpop.xlane.xlu0 %170
      %v172 = vsel %vm168, %v165, 0.0
      %173 = vadd.xlane.f32.xlu0 %v172
      %v174 = vpop.xlane.xlu0 %173
      %v175 = vsel %vm168, %v166, 0.0
      %176 = vadd.xlane.f32.xlu0 %v175
      %v177 = vpop.xlane.xlu0 %176
      %v178 = vsel %vm168, %v167, 0.0
      %179 = vadd.xlane.f32.xlu0 %v178
      %v180 = vpop.xlane.xlu0 %179
      %v181 = vrcp.pop 16.0
      %v182 = vmul.f32 %v171, %v181
      %v183 = vmul.f32 %v174, %v181
      %v184 = vmul.f32 %v177, %v181
      %v185 = vmul.f32 %v180, %v181
      %v186 = vadd.f32 %v182, 1e-06
      %v187 = vadd.f32 %v183, 1e-06
      %v188 = vadd.f32 %v184, 1e-06
      %v189 = vadd.f32 %v185, 1e-06
      %v190 = vrsqrt.pop %v186
      %v191 = vrsqrt.pop %v187
      %v192 = vrsqrt.pop %v188
      %v193 = vrsqrt.pop %v189
      %v194 = vmul.f32 %v160, %v190
      %v195 = vmul.f32 %v161, %v191
      %v196 = vmul.f32 %v162, %v192
      %v197 = vmul.f32 %v163, %v193
      %v198 = vld [vmem:[%s2] sm:$0x1]
      %v200 = vlaneseq
      %v201 = vshrl.u32 %v200, 7
      %v202 = vsub.s32 0, %v201
      %v203 = vrot.slane %v198, %v202
      %v205 = vmul.f32 %v194, %v203
      %v206 = vmul.f32 %v195, %v203
      %v207 = vmul.f32 %v196, %v203
      %v208 = vmul.f32 %v197, %v203
      %v209 = vpack.c.bf16 %v206, %v205
      %v210 = vpack.c.bf16 %v208, %v207
      %v213 = vunpack.c.l.b16 %v209
      %v214 = vunpack.c.h.b16 %v209
      %v215 = vunpack.c.l.b16 %v210
      %v216 = vunpack.c.h.b16 %v210
      %v217 = vpack.c.b16 %v213, %v213
      %v218 = vpack.c.b16 %v214, %v214
      %v219 = vpack.c.b16 %v215, %v215
      %v220 = vpack.c.b16 %v216, %v216
      %vm225 = vcmask 125952
      %226 = vst.msk [vmem:[%s4] sm:$0xf] %vm225, %v217
      %227 = vst.msk [vmem:[%s4 + $0x4] sm:$0xf] %vm225, %v218
      %228 = vst.msk [vmem:[%s4 + $0x8] sm:$0xf] %vm225, %v219
      %229 = vst.msk [vmem:[%s4 + $0xc] sm:$0xf] %vm225, %v220
      %234 = vrot.lane.b32.xlu0 %v164, 112
      %v235 = vpop.permute.xlu0 %234
      %236 = vrot.lane.b32.xlu0 %v165, 112
      %v237 = vpop.permute.xlu0 %236
      %238 = vrot.lane.b32.xlu0 %v166, 112
      %v239 = vpop.permute.xlu0 %238
      %240 = vrot.lane.b32.xlu0 %v167, 112
      %v241 = vpop.permute.xlu0 %240
      %v246 = vsel %vm168, %v235, 0.0
      %247 = vadd.xlane.f32.xlu0 %v246
      %v248 = vpop.xlane.xlu0 %247
      %v249 = vsel %vm168, %v237, 0.0
      %250 = vadd.xlane.f32.xlu0 %v249
      %v251 = vpop.xlane.xlu0 %250
      %v252 = vsel %vm168, %v239, 0.0
      %253 = vadd.xlane.f32.xlu0 %v252
      %v254 = vpop.xlane.xlu0 %253
      %v255 = vsel %vm168, %v241, 0.0
      %256 = vadd.xlane.f32.xlu0 %v255
      %v257 = vpop.xlane.xlu0 %256
      %v258 = vmul.f32 %v248, %v181
      %v259 = vmul.f32 %v251, %v181
      %v260 = vmul.f32 %v254, %v181
      %v261 = vmul.f32 %v257, %v181
      %v262 = vadd.f32 %v258, 1e-06
      %v263 = vadd.f32 %v259, 1e-06
      %v264 = vadd.f32 %v260, 1e-06
      %v265 = vadd.f32 %v261, 1e-06
      %v266 = vrsqrt.pop %v262
      %v267 = vrsqrt.pop %v263
      %v268 = vrsqrt.pop %v264
      %v269 = vrsqrt.pop %v265
      %v270 = vmul.f32 %v160, %v266
      %v271 = vmul.f32 %v161, %v267
      %v272 = vmul.f32 %v162, %v268
      %v273 = vmul.f32 %v163, %v269
      %v274 = vld [vmem:[%s3] sm:$0x1]
      %v276 = vlaneseq
      %v277 = vshrl.u32 %v276, 7
      %v278 = vsub.s32 0, %v277
      %v279 = vrot.slane %v274, %v278
      %280 = vrot.lane.b32.xlu0 %v279, 16
      %v281 = vpop.permute.xlu0 %280
      %v283 = vmul.f32 %v270, %v281
      %v284 = vmul.f32 %v271, %v281
      %v285 = vmul.f32 %v272, %v281
      %v286 = vmul.f32 %v273, %v281
      %v287 = vpack.c.bf16 %v284, %v283
      %v288 = vpack.c.bf16 %v286, %v285
      %v291 = vunpack.c.l.b16 %v287
      %v292 = vunpack.c.h.b16 %v287
      %v293 = vunpack.c.l.b16 %v288
      %v294 = vunpack.c.h.b16 %v288
      %v295 = vpack.c.b16 %v291, %v291
      %v296 = vpack.c.b16 %v292, %v292
      %v297 = vpack.c.b16 %v293, %v293
      %v298 = vpack.c.b16 %v294, %v294
      %299 = vrot.lane.b32.xlu0 %v295, 112
      %v300 = vpop.permute.xlu0 %299
      %301 = vrot.lane.b32.xlu0 %v296, 112
      %v302 = vpop.permute.xlu0 %301
      %303 = vrot.lane.b32.xlu0 %v297, 112
      %v304 = vpop.permute.xlu0 %303
      %305 = vrot.lane.b32.xlu0 %v298, 112
      %v306 = vpop.permute.xlu0 %305
      %311 = vst.msk [vmem:[%s5] sm:$0xf] %vm225, %v300
      %312 = vst.msk [vmem:[%s5 + $0x4] sm:$0xf] %vm225, %v302
      %313 = vst.msk [vmem:[%s5 + $0x8] sm:$0xf] %vm225, %v304
      %314 = vst.msk [vmem:[%s5 + $0xc] sm:$0xf] %vm225, %v306
      %v315 = vpack.c.bf16 %v161, %v160
      %v316 = vpack.c.bf16 %v163, %v162
      %v319 = vunpack.c.l.b16 %v315
      %v320 = vunpack.c.h.b16 %v315
      %v321 = vunpack.c.l.b16 %v316
      %v322 = vunpack.c.h.b16 %v316
      %v323 = vpack.c.b16 %v319, %v319
      %v324 = vpack.c.b16 %v320, %v320
      %v325 = vpack.c.b16 %v321, %v321
      %v326 = vpack.c.b16 %v322, %v322
      %327 = vrot.lane.b32.xlu0 %v323, 96
      %v328 = vpop.permute.xlu0 %327
      %329 = vrot.lane.b32.xlu0 %v324, 96
      %v330 = vpop.permute.xlu0 %329
      %331 = vrot.lane.b32.xlu0 %v325, 96
      %v332 = vpop.permute.xlu0 %331
      %333 = vrot.lane.b32.xlu0 %v326, 96
      %v334 = vpop.permute.xlu0 %333
      %vm339 = vcmask 60416
      %340 = vst.msk [vmem:[%s6] sm:$0xf] %vm339, %v328
      %341 = vst.msk [vmem:[%s6 + $0x4] sm:$0xf] %vm339, %v330
      %342 = vst.msk [vmem:[%s6 + $0x8] sm:$0xf] %vm339, %v332
      %343 = vst.msk [vmem:[%s6 + $0xc] sm:$0xf] %vm339, %v334
    $region33: #{tpu_custom_call.1} parent=1 // pred_fallthru
      _
    // Predicated region
    $region34: #{tpu_custom_call.1} parent=1 // pred_check
      _
    $region35: #{tpu_custom_call.1} parent=1 // pred_check_branch
      %345 = sbr.rel (0) target = $region37
    $region36: #{tpu_custom_call.1} parent=1 // pred_region
      _
    $region37: #{tpu_custom_call.1} parent=1 // pred_fallthru
      _
    // Predicated region
    $region38: #{tpu_custom_call.1} parent=1 // pred_check
      _
    $region39: #{tpu_custom_call.1} parent=1 // pred_check_branch
      %347 = sbr.rel (0) target = $region41
    $region40: #{tpu_custom_call.1} parent=1 // pred_region
      _
    $region41: #{tpu_custom_call.1} parent=1 // pred_fallthru
      _
    // Predicated region
    $region42: #{tpu_custom_call.1} parent=1 // pred_check
      _
    $region43: #{tpu_custom_call.1} parent=1 // pred_check_branch
      %349 = sbr.rel (0) target = $region45
    $region44: #{tpu_custom_call.1} parent=1 // pred_region
      _
    $region45: #{tpu_custom_call.1} parent=1 // pred_fallthru
      _
    // Predicated region
    $region46: #{tpu_custom_call.1} parent=1 // pred_check
      _
    $region47: #{tpu_custom_call.1} parent=1 // pred_check_branch
      %351 = sbr.rel (0) target = $region49
    $region48: #{tpu_custom_call.1} parent=1 // pred_region
      _
    $region49: #{tpu_custom_call.1} parent=1 // pred_fallthru
      _
    // Predicated region
    $region50: #{tpu_custom_call.1} parent=1 // pred_check
      _
    $region51: #{tpu_custom_call.1} parent=1 // pred_check_branch
      %353 = sbr.rel (0) target = $region53
    $region52: #{tpu_custom_call.1} parent=1 // pred_region
      _
    $region53: #{tpu_custom_call.1} parent=1 // pred_fallthru
      _
    // Predicated region
    $region54: #{tpu_custom_call.1} parent=1 // pred_check
      _
    $region55: #{tpu_custom_call.1} parent=1 // pred_check_branch
      %355 = sbr.rel (0) target = $region57
    $region56: #{tpu_custom_call.1} parent=1 // pred_region
      _
    $region57: #{tpu_custom_call.1} parent=1 // pred_fallthru
      _
    %356 = vsyncpa [#allocation4], 1
    %357 = vsyncpa [#allocation6], 1

</llo_original>
